<compile_context>
chip_gen: v7x
topology: tpu7x:2x2x1
jax: 0.10.0
libtpu: 0.0.40
codegen_flags: <defaults>
</compile_context>

<pallas_src>
import functools

import jax
import jax.numpy as jnp
import numpy as np
from jax import lax
from jax.experimental import pallas as pl
from jax.experimental.pallas import tpu as pltpu


def lgm_kernel(label_ref, feat_ref, rhs_sq_ref, rhs_lin_ref,
               bias_dist_ref, slog_ref, bias_like_ref,
               logits_ref, margin_ref, like_ref, *, alpha, tb):
    i = pl.program_id(0)

    feat = feat_ref[...]                                  # [TB, Dp]  f32 (pipelined)
    start = pl.multiple_of(i * tb, tb)
    labels = label_ref[pl.ds(start, tb), :]               # [TB, 1]   int32 (resident)

    TB = feat.shape[0]
    Cp = logits_ref.shape[-1]

    # Two MXU passes against the hoisted, resident RHS (no LHS concat):
    #   acc[:, :Cp]  = sum_d f^2 * (1/cov)  - 2 sum_d f * (c/cov)   (dist minus bias)
    #   acc[:, Cp:]  = sum_d f^2            - 2 sum_d f * c         (udist minus bias)
    acc = lax.dot_general(feat * feat, rhs_sq_ref[...],
                          (((1,), (0,)), ((), ())),
                          preferred_element_type=jnp.float32)        # [TB, 2Cp]
    acc = acc + lax.dot_general(feat, rhs_lin_ref[...],
                                (((1,), (0,)), ((), ())),
                                preferred_element_type=jnp.float32)  # [TB, 2Cp]

    dist = acc[:, :Cp] + bias_dist_ref[...]               # sum_d (f-c)^2 / cov
    sd = dist + slog_ref[...]                             # slog + dist (slog exact)
    like_terms = acc[:, Cp:] + bias_like_ref[...]         # ||f-c||^2 + slog

    # one-hot built in-kernel (padded rows carry label -1 -> all-zero row)
    onehot = (lax.broadcasted_iota(jnp.int32, (TB, Cp), 1) == labels
              ).astype(jnp.float32)                       # [TB, Cp]

    logits_ref[...] = -0.5 * sd
    # margin = -0.5*(slog + dist*(1 + alpha*onehot)) = logits - 0.5*alpha*onehot*dist
    margin_ref[...] = -0.5 * (sd + alpha * (onehot * dist))

    # Lane-wide per-block likelihood partial: sublane reduce only; the cross-lane
    # reduce + 1/batch_size scale happen once in the wrapper.
    part = jnp.sum(onehot * like_terms, axis=0, keepdims=True)       # [1, Cp]
    like_ref[0] = 0.5 * part


def _round_up(x, m):
    return ((x + m - 1) // m) * m


def lgm_loss(feat, label, centers, log_covs, alpha):
    B, D = feat.shape
    C = centers.shape[0]

    f32 = jnp.float32
    Dp = _round_up(D, 128)                   # aligned contraction dim
    Cp = _round_up(C, 128)                   # lane-dense class/output dim
    # Keep TB <= 256 for the v7x 64 MiB VMEM budget.
    # TODO(synk): raise TB to 512 on v5e/v6e when B is large (128 MiB VMEM).
    TB = min(256, _round_up(B, 8))
    Bp = _round_up(B, TB)
    nb = Bp // TB

    feat_p = jnp.zeros((Bp, Dp), f32).at[:B, :D].set(feat.astype(f32))
    centers_p = jnp.zeros((Cp, Dp), f32).at[:C, :D].set(centers.astype(f32))
    logcovs_p = jnp.zeros((Cp, Dp), f32).at[:C, :D].set(log_covs.astype(f32))
    # padded batch rows get label -1 => zero one-hot row => zero likelihood contribution
    label_p = jnp.full((Bp, 1), -1, jnp.int32).at[:B, 0].set(label.astype(jnp.int32))

    # --- Hoisted class-side preprocessing (computed ONCE, resident in-kernel) ---
    inv = jnp.exp(-logcovs_p)                                        # 1/cov        [Cp, Dp]
    cinv = centers_p * inv                                           # c/cov        [Cp, Dp]
    rhs_sq = jnp.concatenate([inv, jnp.ones((Cp, Dp), f32)], axis=0).T        # [Dp, 2Cp]
    rhs_lin = jnp.concatenate([-2.0 * cinv, -2.0 * centers_p], axis=0).T      # [Dp, 2Cp]
    bias_dist = jnp.sum(centers_p * cinv, axis=1)[None, :]           # sum_d c^2/cov [1, Cp]
    slog = jnp.sum(logcovs_p, axis=1)[None, :]                       # sum_d logcov  [1, Cp]
    bias_like = jnp.sum(centers_p * centers_p, axis=1)[None, :] + slog  # sum_d c^2 + slog

    logits_p, margin_p, like_part = pl.pallas_call(
        functools.partial(lgm_kernel, alpha=float(alpha), tb=TB),
        grid=(nb,),
        in_specs=[
            pl.BlockSpec((Bp, 1), lambda i: (0, 0)),       # labels     (resident)
            pl.BlockSpec((TB, Dp), lambda i: (i, 0)),      # feat       (pipelined)
            pl.BlockSpec((Dp, 2 * Cp), lambda i: (0, 0)),  # rhs_sq     (resident)
            pl.BlockSpec((Dp, 2 * Cp), lambda i: (0, 0)),  # rhs_lin    (resident)
            pl.BlockSpec((1, Cp), lambda i: (0, 0)),       # bias_dist  (resident)
            pl.BlockSpec((1, Cp), lambda i: (0, 0)),       # slog       (resident)
            pl.BlockSpec((1, Cp), lambda i: (0, 0)),       # bias_like  (resident)
        ],
        out_specs=(
            pl.BlockSpec((TB, Cp), lambda i: (i, 0)),      # logits
            pl.BlockSpec((TB, Cp), lambda i: (i, 0)),      # margin_logits
            pl.BlockSpec((1, 1, Cp), lambda i: (i, 0, 0)),  # likelihood lane-partials
        ),
        out_shape=(
            jax.ShapeDtypeStruct((Bp, Cp), f32),
            jax.ShapeDtypeStruct((Bp, Cp), f32),
            jax.ShapeDtypeStruct((nb, 1, Cp), f32),
        ),
        compiler_params=pltpu.CompilerParams(
            dimension_semantics=("parallel",),             # no carried state -> megacore-friendly
            vmem_limit_bytes=48 * 1024 * 1024,             # within v7x's 64 MiB
        ),
    )(label_p, feat_p, rhs_sq, rhs_lin, bias_dist, slog, bias_like)

    likelihood = jnp.sum(like_part) * (1.0 / B)
    return logits_p[:B, :C], margin_p[:B, :C], likelihood


def lgm_ref(feat, label, centers, log_covs, alpha):
    # pure-JAX reference mirroring the PyTorch forward
    covs = jnp.exp(log_covs)
    diff = feat[:, None, :] - centers[None, :, :]
    dist = jnp.sum(diff * diff / covs[None], axis=-1)
    onehot = jax.nn.one_hot(label, centers.shape[0], dtype=jnp.float32) * alpha + 1.0
    slog = jnp.sum(log_covs, axis=-1)
    margin_logits = -0.5 * (slog[None, :] + dist * onehot)
    logits = -0.5 * (slog[None, :] + dist)
    cdiff = feat - centers[label]
    cdist = jnp.sum(cdiff ** 2) / 2.0
    reg = 0.5 * jnp.sum(slog[label])
    likelihood = (cdist + reg) / feat.shape[0]
    return logits, margin_logits, likelihood


if __name__ == "__main__":
    key = jax.random.PRNGKey(0)
    k1, k2, k3, k4 = jax.random.split(key, 4)

    B, C, D = 8, 16, 128          # batch, num_classes, feat_dim
    alpha = 0.1

    feat = jax.random.normal(k1, (B, D), jnp.float32)
    label = jax.random.randint(k2, (B,), 0, C, jnp.int32)

    # parameters (shapes from LGMLoss.__init__): centers ~ randn, log_covs small noise
    centers = jax.random.normal(k3, (C, D), jnp.float32)
    log_covs = 0.1 * jax.random.normal(k4, (C, D), jnp.float32)

    logits, margin_logits, like = lgm_loss(feat, label, centers, log_covs, alpha)
    jax.block_until_ready((logits, margin_logits, like))

    r_logits, r_margin, r_like = lgm_ref(feat, label, centers, log_covs, alpha)
    np.testing.assert_allclose(np.asarray(logits), np.asarray(r_logits),
                               rtol=1e-2, atol=1e-2)
    np.testing.assert_allclose(np.asarray(margin_logits), np.asarray(r_margin),
                               rtol=1e-2, atol=1e-2)
    np.testing.assert_allclose(float(like), float(r_like), rtol=1e-2, atol=1e-2)

    print("KERNEL_OK")
</pallas_src>

<mosaic_0001>
module attributes {stable_mosaic.version = 11 : i64} {
  func.func @lgm_kernel(%arg0: i32, %arg1: memref<8x1xi32, #tpu.memory_space<vmem>>, %arg2: memref<8x128xf32, #tpu.memory_space<vmem>>, %arg3: memref<128x256xf32, #tpu.memory_space<vmem>>, %arg4: memref<128x256xf32, #tpu.memory_space<vmem>>, %arg5: memref<1x128xf32, #tpu.memory_space<vmem>>, %arg6: memref<1x128xf32, #tpu.memory_space<vmem>>, %arg7: memref<1x128xf32, #tpu.memory_space<vmem>>, %arg8: memref<8x128xf32, #tpu.memory_space<vmem>>, %arg9: memref<8x128xf32, #tpu.memory_space<vmem>>, %arg10: memref<1x1x128xf32, #tpu.memory_space<vmem>>) attributes {dimension_semantics = [#tpu.dimension_semantics<parallel>], iteration_bounds = array<i64: 1>, scalar_prefetch = 0 : i64, scratch_operands = 0 : i64, tpu.core_type = #tpu.core_type<tc>, window_params = [{pipeline_mode = #tpu.pipeline_mode<synchronous>, transform_indices = @transform_0, window_bounds = array<i64: 8, 1>}, {transform_indices = @transform_1, window_bounds = array<i64: 8, 128>}, {pipeline_mode = #tpu.pipeline_mode<synchronous>, transform_indices = @transform_2, window_bounds = array<i64: 128, 256>}, {pipeline_mode = #tpu.pipeline_mode<synchronous>, transform_indices = @transform_3, window_bounds = array<i64: 128, 256>}, {pipeline_mode = #tpu.pipeline_mode<synchronous>, transform_indices = @transform_4, window_bounds = array<i64: 1, 128>}, {pipeline_mode = #tpu.pipeline_mode<synchronous>, transform_indices = @transform_5, window_bounds = array<i64: 1, 128>}, {pipeline_mode = #tpu.pipeline_mode<synchronous>, transform_indices = @transform_6, window_bounds = array<i64: 1, 128>}, {transform_indices = @transform_7, window_bounds = array<i64: 8, 128>}, {transform_indices = @transform_8, window_bounds = array<i64: 8, 128>}, {transform_indices = @transform_9, window_bounds = array<i64: 1, 1, 128>}]} {
    %c0 = arith.constant 0 : index
    %c0_0 = arith.constant 0 : index
    %0 = vector.load %arg2[%c0, %c0_0] : memref<8x128xf32, #tpu.memory_space<vmem>>, vector<8x128xf32>
    %c8_i32 = arith.constant 8 : i32
    %1 = arith.muli %arg0, %c8_i32 : i32
    %2 = tpu.assume_multiple %1, 8 : i32
    %3 = arith.index_cast %2 : i32 to index
    %c0_1 = arith.constant 0 : index
    %4 = vector.load %arg1[%3, %c0_1] : memref<8x1xi32, #tpu.memory_space<vmem>>, vector<8x1xi32>
    %5 = arith.mulf %0, %0 : vector<8x128xf32>
    %c0_2 = arith.constant 0 : index
    %c0_3 = arith.constant 0 : index
    %6 = vector.load %arg3[%c0_2, %c0_3] : memref<128x256xf32, #tpu.memory_space<vmem>>, vector<128x256xf32>
    %cst = arith.constant dense<0.000000e+00> : vector<8x256xf32>
    %7 = tpu.matmul %5, %6, %cst {dimension_numbers = #tpu.dot_dimension_numbers<[1], [0], [0], [1], [0, 0, 1, 1], [], []>} : vector<8x128xf32>, vector<128x256xf32>, vector<8x256xf32> -> vector<8x256xf32>
    %c0_4 = arith.constant 0 : index
    %c0_5 = arith.constant 0 : index
    %8 = vector.load %arg4[%c0_4, %c0_5] : memref<128x256xf32, #tpu.memory_space<vmem>>, vector<128x256xf32>
    %cst_6 = arith.constant dense<0.000000e+00> : vector<8x256xf32>
    %9 = tpu.matmul %0, %8, %cst_6 {dimension_numbers = #tpu.dot_dimension_numbers<[1], [0], [0], [1], [0, 0, 1, 1], [], []>} : vector<8x128xf32>, vector<128x256xf32>, vector<8x256xf32> -> vector<8x256xf32>
    %10 = arith.addf %7, %9 : vector<8x256xf32>
    %11 = vector.extract_strided_slice %10 {offsets = [0, 0], sizes = [8, 128], strides = [1, 1]} : vector<8x256xf32> to vector<8x128xf32>
    %c0_7 = arith.constant 0 : index
    %c0_8 = arith.constant 0 : index
    %12 = vector.load %arg5[%c0_7, %c0_8] : memref<1x128xf32, #tpu.memory_space<vmem>>, vector<1x128xf32>
    %13 = vector.broadcast %12 : vector<1x128xf32> to vector<8x128xf32>
    %14 = arith.addf %11, %13 : vector<8x128xf32>
    %c0_9 = arith.constant 0 : index
    %c0_10 = arith.constant 0 : index
    %15 = vector.load %arg6[%c0_9, %c0_10] : memref<1x128xf32, #tpu.memory_space<vmem>>, vector<1x128xf32>
    %16 = vector.broadcast %15 : vector<1x128xf32> to vector<8x128xf32>
    %17 = arith.addf %14, %16 : vector<8x128xf32>
    %18 = vector.extract_strided_slice %10 {offsets = [0, 128], sizes = [8, 128], strides = [1, 1]} : vector<8x256xf32> to vector<8x128xf32>
    %c0_11 = arith.constant 0 : index
    %c0_12 = arith.constant 0 : index
    %19 = vector.load %arg7[%c0_11, %c0_12] : memref<1x128xf32, #tpu.memory_space<vmem>>, vector<1x128xf32>
    %20 = vector.broadcast %19 : vector<1x128xf32> to vector<8x128xf32>
    %21 = arith.addf %18, %20 : vector<8x128xf32>
    %22 = tpu.iota {dimensions = array<i32: 1>} : vector<8x128xi32>
    %23 = vector.broadcast %4 : vector<8x1xi32> to vector<8x128xi32>
    %24 = arith.cmpi eq, %22, %23 : vector<8x128xi32>
    %25 = arith.extui %24 : vector<8x128xi1> to vector<8x128xi32>
    %26 = arith.sitofp %25 : vector<8x128xi32> to vector<8x128xf32>
    %cst_13 = arith.constant -5.000000e-01 : f32
    %27 = vector.broadcast %cst_13 : f32 to vector<8x128xf32>
    %28 = arith.mulf %27, %17 : vector<8x128xf32>
    %c0_14 = arith.constant 0 : index
    %c0_15 = arith.constant 0 : index
    %29 = vector.load %arg8[%c0_14, %c0_15] : memref<8x128xf32, #tpu.memory_space<vmem>>, vector<8x128xf32>
    tpu.vector_store %arg8[%c0_14, %c0_15], %28 {strides = array<i32>} : memref<8x128xf32, #tpu.memory_space<vmem>>, vector<8x128xf32>,
    %30 = arith.mulf %26, %14 : vector<8x128xf32>
    %cst_16 = arith.constant 1.000000e-01 : f32
    %31 = vector.broadcast %cst_16 : f32 to vector<8x128xf32>
    %32 = arith.mulf %31, %30 : vector<8x128xf32>
    %33 = arith.addf %17, %32 : vector<8x128xf32>
    %cst_17 = arith.constant -5.000000e-01 : f32
    %34 = vector.broadcast %cst_17 : f32 to vector<8x128xf32>
    %35 = arith.mulf %34, %33 : vector<8x128xf32>
    %c0_18 = arith.constant 0 : index
    %c0_19 = arith.constant 0 : index
    %36 = vector.load %arg9[%c0_18, %c0_19] : memref<8x128xf32, #tpu.memory_space<vmem>>, vector<8x128xf32>
    tpu.vector_store %arg9[%c0_18, %c0_19], %35 {strides = array<i32>} : memref<8x128xf32, #tpu.memory_space<vmem>>, vector<8x128xf32>,
    %37 = arith.mulf %26, %21 : vector<8x128xf32>
    %cst_20 = arith.constant dense<0.000000e+00> : vector<128xf32>
    %38 = vector.multi_reduction <add>, %37, %cst_20 [0] : vector<8x128xf32> to vector<128xf32>
    %39 = vector.shape_cast %38 : vector<128xf32> to vector<1x128xf32>
    %cst_21 = arith.constant 5.000000e-01 : f32
    %40 = vector.broadcast %cst_21 : f32 to vector<1x128xf32>
    %41 = arith.mulf %40, %39 : vector<1x128xf32>
    %c0_22 = arith.constant 0 : index
    %c0_23 = arith.constant 0 : index
    %c0_24 = arith.constant 0 : index
    %42 = vector.load %arg10[%c0_22, %c0_23, %c0_24] : memref<1x1x128xf32, #tpu.memory_space<vmem>>, vector<1x1x128xf32>
    %43 = vector.shape_cast %42 : vector<1x1x128xf32> to vector<1x128xf32>
    %44 = vector.shape_cast %41 : vector<1x128xf32> to vector<1x1x128xf32>
    tpu.vector_store %arg10[%c0_22, %c0_23, %c0_24], %44 {strides = array<i32>} : memref<1x1x128xf32, #tpu.memory_space<vmem>>, vector<1x1x128xf32>,
    return
  }
  func.func @transform_0(%arg0: i32) -> (i32, i32) {
    %c0_i32 = arith.constant 0 : i32
    %c0_i32_0 = arith.constant 0 : i32
    %c0_i32_1 = arith.constant 0 : i32
    return %c0_i32, %c0_i32_0 : i32, i32
  }
  func.func @transform_1(%arg0: i32) -> (i32, i32) {
    %c0_i32 = arith.constant 0 : i32
    %c0_i32_0 = arith.constant 0 : i32
    return %arg0, %c0_i32 : i32, i32
  }
  func.func @transform_2(%arg0: i32) -> (i32, i32) {
    %c0_i32 = arith.constant 0 : i32
    %c0_i32_0 = arith.constant 0 : i32
    %c0_i32_1 = arith.constant 0 : i32
    return %c0_i32, %c0_i32_0 : i32, i32
  }
  func.func @transform_3(%arg0: i32) -> (i32, i32) {
    %c0_i32 = arith.constant 0 : i32
    %c0_i32_0 = arith.constant 0 : i32
    %c0_i32_1 = arith.constant 0 : i32
    return %c0_i32, %c0_i32_0 : i32, i32
  }
  func.func @transform_4(%arg0: i32) -> (i32, i32) {
    %c0_i32 = arith.constant 0 : i32
    %c0_i32_0 = arith.constant 0 : i32
    %c0_i32_1 = arith.constant 0 : i32
    return %c0_i32, %c0_i32_0 : i32, i32
  }
  func.func @transform_5(%arg0: i32) -> (i32, i32) {
    %c0_i32 = arith.constant 0 : i32
    %c0_i32_0 = arith.constant 0 : i32
    %c0_i32_1 = arith.constant 0 : i32
    return %c0_i32, %c0_i32_0 : i32, i32
  }
  func.func @transform_6(%arg0: i32) -> (i32, i32) {
    %c0_i32 = arith.constant 0 : i32
    %c0_i32_0 = arith.constant 0 : i32
    %c0_i32_1 = arith.constant 0 : i32
    return %c0_i32, %c0_i32_0 : i32, i32
  }
  func.func @transform_7(%arg0: i32) -> (i32, i32) {
    %c0_i32 = arith.constant 0 : i32
    %c0_i32_0 = arith.constant 0 : i32
    return %arg0, %c0_i32 : i32, i32
  }
  func.func @transform_8(%arg0: i32) -> (i32, i32) {
    %c0_i32 = arith.constant 0 : i32
    %c0_i32_0 = arith.constant 0 : i32
    return %arg0, %c0_i32 : i32, i32
  }
  func.func @transform_9(%arg0: i32) -> (i32, i32, i32) {
    %c0_i32 = arith.constant 0 : i32
    %c0_i32_0 = arith.constant 0 : i32
    %c0_i32_1 = arith.constant 0 : i32
    return %arg0, %c0_i32, %c0_i32_0 : i32, i32, i32
  }
}

</mosaic_0001>

<llo_original>
// kernel: tpu_custom_call.1
$region0: #{tpu_custom_call.1}
  #allocation0 [shape = 'u32[]', space=smem, size = 0x4, offset = 0x4, fixed_abs, tag = 'smem constant byte address 0x4 - core index']
  #allocation1 [shape = 'u32[144,128]{1,0:T(1,128)}', space=vmem, size = 0x12000, scoped, tag = 'internal scratch']
  %s0 = inlined_call_operand.vmem [shape: s32[8,1], index: 0, kind: input, shape index: {}]
  %s1 = inlined_call_operand.vmem [shape: f32[8,128], index: 1, kind: input, shape index: {}]
  %s2 = inlined_call_operand.hbm [shape: f32[128,256], index: 2, kind: input, shape index: {}]
  %s3 = inlined_call_operand.hbm [shape: f32[128,256], index: 3, kind: input, shape index: {}]
  %s4 = inlined_call_operand.vmem [shape: f32[1,128], index: 4, kind: input, shape index: {}]
  %s5 = inlined_call_operand.vmem [shape: f32[1,128], index: 5, kind: input, shape index: {}]
  %s6 = inlined_call_operand.vmem [shape: f32[1,128], index: 6, kind: input, shape index: {}]
  %s7 = inlined_call_operand.hbm [shape: f32[8,128], index: 7, kind: output, shape index: {0}]
  %s8 = inlined_call_operand.hbm [shape: f32[8,128], index: 8, kind: output, shape index: {1}]
  %s9 = inlined_call_operand.hbm [shape: f32[1,1,128], index: 9, kind: output, shape index: {2}]
  %10 = xla_tuple %s7, %s8, %s9
  %s11 = sld [smem:[#allocation0]]
  $region62: #{tpu_custom_call.1} parent=0
    _
  %s13 = ssub.s32 1, %s11
  %s14 = scalar_select 0, %s13, %s11
  $region1: #{tpu_custom_call.1} parent=0
    #allocation2 [shape = 'u8[131072]{0}', space=vmem, size = 0x20000, scoped, tag = 'input window, operand 2, single buffered']
    #allocation3 [shape = 's32[1]{0}', space=sflag, size = 0x4, scoped, tag = 'scoped memory for tpu_custom_call.1']
    #allocation4 [shape = 's32[1]{0}', space=sflag, size = 0x4, scoped, tag = 'scoped memory for tpu_custom_call.1']
    #allocation5 [shape = 'u8[131072]{0}', space=vmem, size = 0x20000, scoped, tag = 'input window, operand 3, single buffered']
    #allocation6 [shape = 's32[1]{0}', space=sflag, size = 0x4, scoped, tag = 'scoped memory for tpu_custom_call.1']
    #allocation7 [shape = 'u8[4096]{0}', space=vmem, size = 0x1000, scoped, tag = 'output window, operand 0, single buffered']
    #allocation8 [shape = 'u8[4096]{0}', space=vmem, size = 0x1000, scoped, tag = 'output window, operand 1, single buffered']
    #allocation9 [shape = 's32[1]{0}', space=sflag, size = 0x4, scoped, tag = 'scoped memory for tpu_custom_call.1']
    #allocation10 [shape = 'u8[512]{0}', space=vmem, size = 0x400, scoped, tag = 'output window, operand 2, single buffered']
    %15 = vsyncpa [#allocation3], 0
    %16 = vsyncpa [#allocation6], 0
    %17 = vsyncpa [#allocation4], 0
    %18 = vsyncpa [#allocation9], 0
    // Predicated region
    $region2: #{tpu_custom_call.1} parent=1 // pred_check
      _
    $region3: #{tpu_custom_call.1} parent=1 // pred_check_branch
      %20 = sbr.rel (0) target = $region5
    $region4: #{tpu_custom_call.1} parent=1 // pred_region
      _
    $region5: #{tpu_custom_call.1} parent=1 // pred_fallthru
      _
    // Predicated region
    $region6: #{tpu_custom_call.1} parent=1 // pred_check
      _
    $region7: #{tpu_custom_call.1} parent=1 // pred_check_branch
      %22 = sbr.rel (0) target = $region9
    $region8: #{tpu_custom_call.1} parent=1 // pred_region
      _
    $region9: #{tpu_custom_call.1} parent=1 // pred_fallthru
      _
    // Predicated region
    $region10: #{tpu_custom_call.1} parent=1 // pred_check
      _
    $region11: #{tpu_custom_call.1} parent=1 // pred_check_branch
      %24 = sbr.rel (0) target = $region13
    $region12: #{tpu_custom_call.1} parent=1 // pred_region
      %s26 = ssub.s32 4096, 4096
      %27 = vsyncadd [#allocation3], %s26
      %s28 = sshll.u32 [#allocation2], 4
      %s29 = int_to_ptr.vmem [resolvable:$true] %s28
      %34 = dma.hbm_to_vmem [thread:$0]  %s2, 4096, %s29, [#allocation3], 256, 256, 16
    $region13: #{tpu_custom_call.1} parent=1 // pred_fallthru
      _
    // Predicated region
    $region14: #{tpu_custom_call.1} parent=1 // pred_check
      _
    $region15: #{tpu_custom_call.1} parent=1 // pred_check_branch
      %36 = sbr.rel (0) target = $region17
    $region16: #{tpu_custom_call.1} parent=1 // pred_region
      %s38 = ssub.s32 4096, 4096
      %39 = vsyncadd [#allocation6], %s38
      %s40 = sshll.u32 [#allocation5], 4
      %s41 = int_to_ptr.vmem [resolvable:$true] %s40
      %46 = dma.hbm_to_vmem [thread:$0]  %s3, 4096, %s41, [#allocation6], 256, 256, 16
    $region17: #{tpu_custom_call.1} parent=1 // pred_fallthru
      _
    // Predicated region
    $region18: #{tpu_custom_call.1} parent=1 // pred_check
      _
    $region19: #{tpu_custom_call.1} parent=1 // pred_check_branch
      %48 = sbr.rel (0) target = $region21
    $region20: #{tpu_custom_call.1} parent=1 // pred_region
      _
    $region21: #{tpu_custom_call.1} parent=1 // pred_fallthru
      _
    // Predicated region
    $region22: #{tpu_custom_call.1} parent=1 // pred_check
      _
    $region23: #{tpu_custom_call.1} parent=1 // pred_check_branch
      %50 = sbr.rel (0) target = $region25
    $region24: #{tpu_custom_call.1} parent=1 // pred_region
      _
    $region25: #{tpu_custom_call.1} parent=1 // pred_fallthru
      _
    // Predicated region
    $region26: #{tpu_custom_call.1} parent=1 // pred_check
      _
    $region27: #{tpu_custom_call.1} parent=1 // pred_check_branch
      %52 = sbr.rel (0) target = $region29
    $region28: #{tpu_custom_call.1} parent=1 // pred_region
      _
    $region29: #{tpu_custom_call.1} parent=1 // pred_fallthru
      _
    // Predicated region
    $region30: #{tpu_custom_call.1} parent=1 // pred_check
      _
    $region31: #{tpu_custom_call.1} parent=1 // pred_check_branch
      %54 = sbr.rel (0) target = $region33
    $region32: #{tpu_custom_call.1} parent=1 // pred_region
      %55 = dma.done [#allocation3], 4096
    $region33: #{tpu_custom_call.1} parent=1 // pred_fallthru
      _
    // Predicated region
    $region34: #{tpu_custom_call.1} parent=1 // pred_check
      _
    $region35: #{tpu_custom_call.1} parent=1 // pred_check_branch
      %57 = sbr.rel (0) target = $region37
    $region36: #{tpu_custom_call.1} parent=1 // pred_region
      %58 = dma.done [#allocation6], 4096
    $region37: #{tpu_custom_call.1} parent=1 // pred_fallthru
      _
    %v59 = vld [vmem:[%s1] sm:$0xff]
    %s60 = smul.u32 0, 8
    %s61 = scalar_lea.vmem %s0, %s60
    %v62 = vld [vmem:[%s61] sm:$0xff]
    %v63 = vmul.f32 %v59, %v59
    %v64 = vld [vmem:[#allocation2] sm:$0xff]
    %v65 = vld [vmem:[#allocation2 + $0x8] sm:$0xff]
    %v66 = vld [vmem:[#allocation2 + $0x10] sm:$0xff]
    %v67 = vld [vmem:[#allocation2 + $0x18] sm:$0xff]
    %v68 = vld [vmem:[#allocation2 + $0x20] sm:$0xff]
    %v69 = vld [vmem:[#allocation2 + $0x28] sm:$0xff]
    %v70 = vld [vmem:[#allocation2 + $0x30] sm:$0xff]
    %v71 = vld [vmem:[#allocation2 + $0x38] sm:$0xff]
    %v72 = vld [vmem:[#allocation2 + $0x40] sm:$0xff]
    %v73 = vld [vmem:[#allocation2 + $0x48] sm:$0xff]
    %v74 = vld [vmem:[#allocation2 + $0x50] sm:$0xff]
    %v75 = vld [vmem:[#allocation2 + $0x58] sm:$0xff]
    %v76 = vld [vmem:[#allocation2 + $0x60] sm:$0xff]
    %v77 = vld [vmem:[#allocation2 + $0x68] sm:$0xff]
    %v78 = vld [vmem:[#allocation2 + $0x70] sm:$0xff]
    %v79 = vld [vmem:[#allocation2 + $0x78] sm:$0xff]
    %v80 = vld [vmem:[#allocation2 + $0x80] sm:$0xff]
    %v81 = vld [vmem:[#allocation2 + $0x88] sm:$0xff]
    %v82 = vld [vmem:[#allocation2 + $0x90] sm:$0xff]
    %v83 = vld [vmem:[#allocation2 + $0x98] sm:$0xff]
    %v84 = vld [vmem:[#allocation2 + $0xa0] sm:$0xff]
    %v85 = vld [vmem:[#allocation2 + $0xa8] sm:$0xff]
    %v86 = vld [vmem:[#allocation2 + $0xb0] sm:$0xff]
    %v87 = vld [vmem:[#allocation2 + $0xb8] sm:$0xff]
    %v88 = vld [vmem:[#allocation2 + $0xc0] sm:$0xff]
    %v89 = vld [vmem:[#allocation2 + $0xc8] sm:$0xff]
    %v90 = vld [vmem:[#allocation2 + $0xd0] sm:$0xff]
    %v91 = vld [vmem:[#allocation2 + $0xd8] sm:$0xff]
    %v92 = vld [vmem:[#allocation2 + $0xe0] sm:$0xff]
    %v93 = vld [vmem:[#allocation2 + $0xe8] sm:$0xff]
    %v94 = vld [vmem:[#allocation2 + $0xf0] sm:$0xff]
    %v95 = vld [vmem:[#allocation2 + $0xf8] sm:$0xff]
    %v96 = vld [vmem:[#allocation5] sm:$0xff]
    %v97 = vld [vmem:[#allocation5 + $0x8] sm:$0xff]
    %v98 = vld [vmem:[#allocation5 + $0x10] sm:$0xff]
    %v99 = vld [vmem:[#allocation5 + $0x18] sm:$0xff]
    %v100 = vld [vmem:[#allocation5 + $0x20] sm:$0xff]
    %v101 = vld [vmem:[#allocation5 + $0x28] sm:$0xff]
    %v102 = vld [vmem:[#allocation5 + $0x30] sm:$0xff]
    %v103 = vld [vmem:[#allocation5 + $0x38] sm:$0xff]
    %v104 = vld [vmem:[#allocation5 + $0x40] sm:$0xff]
    %v105 = vld [vmem:[#allocation5 + $0x48] sm:$0xff]
    %v106 = vld [vmem:[#allocation5 + $0x50] sm:$0xff]
    %v107 = vld [vmem:[#allocation5 + $0x58] sm:$0xff]
    %v108 = vld [vmem:[#allocation5 + $0x60] sm:$0xff]
    %v109 = vld [vmem:[#allocation5 + $0x68] sm:$0xff]
    %v110 = vld [vmem:[#allocation5 + $0x70] sm:$0xff]
    %v111 = vld [vmem:[#allocation5 + $0x78] sm:$0xff]
    %v112 = vld [vmem:[#allocation5 + $0x80] sm:$0xff]
    %v113 = vld [vmem:[#allocation5 + $0x88] sm:$0xff]
    %v114 = vld [vmem:[#allocation5 + $0x90] sm:$0xff]
    %v115 = vld [vmem:[#allocation5 + $0x98] sm:$0xff]
    %v116 = vld [vmem:[#allocation5 + $0xa0] sm:$0xff]
    %v117 = vld [vmem:[#allocation5 + $0xa8] sm:$0xff]
    %v118 = vld [vmem:[#allocation5 + $0xb0] sm:$0xff]
    %v119 = vld [vmem:[#allocation5 + $0xb8] sm:$0xff]
    %v120 = vld [vmem:[#allocation5 + $0xc0] sm:$0xff]
    %v121 = vld [vmem:[#allocation5 + $0xc8] sm:$0xff]
    %v122 = vld [vmem:[#allocation5 + $0xd0] sm:$0xff]
    %v123 = vld [vmem:[#allocation5 + $0xd8] sm:$0xff]
    %v124 = vld [vmem:[#allocation5 + $0xe0] sm:$0xff]
    %v125 = vld [vmem:[#allocation5 + $0xe8] sm:$0xff]
    %v126 = vld [vmem:[#allocation5 + $0xf0] sm:$0xff]
    %v127 = vld [vmem:[#allocation5 + $0xf8] sm:$0xff]
    %128 = vmatprep.subr.mxu0 %v97
    %129 = vmatpush1.msra.mxu0 %v96
    %130 = vmatprep.subr.mxu0 %v99
    %131 = vmatpush1.msra.mxu0 %v98
    %132 = vmatprep.subr.mxu0 %v101
    %133 = vmatpush1.msra.mxu0 %v100
    %134 = vmatprep.subr.mxu0 %v103
    %135 = vmatpush1.msra.mxu0 %v102
    %136 = vmatprep.subr.mxu0 %v105
    %137 = vmatpush1.msra.mxu0 %v104
    %138 = vmatprep.subr.mxu0 %v107
    %139 = vmatpush1.msra.mxu0 %v106
    %140 = vmatprep.subr.mxu0 %v109
    %141 = vmatpush1.msra.mxu0 %v108
    %142 = vmatprep.subr.mxu0 %v111
    %143 = vmatpush1.msra.mxu0 %v110
    %144 = vmatprep.subr.mxu0 %v113
    %145 = vmatpush1.msra.mxu0 %v112
    %146 = vmatprep.subr.mxu0 %v115
    %147 = vmatpush1.msra.mxu0 %v114
    %148 = vmatprep.subr.mxu0 %v117
    %149 = vmatpush1.msra.mxu0 %v116
    %150 = vmatprep.subr.mxu0 %v119
    %151 = vmatpush1.msra.mxu0 %v118
    %152 = vmatprep.subr.mxu0 %v121
    %153 = vmatpush1.msra.mxu0 %v120
    %154 = vmatprep.subr.mxu0 %v123
    %155 = vmatpush1.msra.mxu0 %v122
    %156 = vmatprep.subr.mxu0 %v125
    %157 = vmatpush1.msra.mxu0 %v124
    %158 = vmatprep.subr.mxu0 %v127
    %159 = vmatpush1.msra.mxu0 %v126
    %160 = vmatprep.subr.mxu0 0.0
    %161 = vmatpush1.msra.mxu0 0.0
    %162 = vmatprep.subr.mxu0 0.0
    %163 = vmatpush1.msra.mxu0 0.0
    %164 = vmatprep.subr.mxu0 0.0
    %165 = vmatpush1.msra.mxu0 0.0
    %166 = vmatprep.subr.mxu0 0.0
    %167 = vmatpush1.msra.mxu0 0.0
    %168 = vmatprep.subr.mxu0 0.0
    %169 = vmatpush1.msra.mxu0 0.0
    %170 = vmatprep.subr.mxu0 0.0
    %171 = vmatpush1.msra.mxu0 0.0
    %172 = vmatprep.subr.mxu0 0.0
    %173 = vmatpush1.msra.mxu0 0.0
    %174 = vmatprep.subr.mxu0 0.0
    %175 = vmatpush1.msra.mxu0 0.0
    %176 = vmatprep.subr.mxu0 0.0
    %177 = vmatpush1.msra.mxu0 0.0
    %178 = vmatprep.subr.mxu0 0.0
    %179 = vmatpush1.msra.mxu0 0.0
    %180 = vmatprep.subr.mxu0 0.0
    %181 = vmatpush1.msra.mxu0 0.0
    %182 = vmatprep.subr.mxu0 0.0
    %183 = vmatpush1.msra.mxu0 0.0
    %184 = vmatprep.subr.mxu0 0.0
    %185 = vmatpush1.msra.mxu0 0.0
    %186 = vmatprep.subr.mxu0 0.0
    %187 = vmatpush1.msra.mxu0 0.0
    %188 = vmatprep.subr.mxu0 0.0
    %189 = vmatpush1.msra.mxu0 0.0
    %190 = vmatprep.subr.mxu0 0.0
    %191 = vmatpush1.msra.mxu0 0.0
    %192 = vmatprep.mubr.f32.mxu0 0.0
    %193 = vmatmul.mubr.f32.gmra.mrb[0].mxu0 %v59
    %v194 = vpop.f32.mrb[0].mxu0
    %v195 = vadd.f32 0.0, %v194
    %v196 = vpop.f32.mrb[0].mxu0
    %v197 = vadd.f32 0.0, %v196
    %198 = vdwg.mxu0
    %199 = vmatprep.subr.mxu0 %v65
    %200 = vmatpush1.msra.mxu0 %v64
    %201 = vmatprep.subr.mxu0 %v67
    %202 = vmatpush1.msra.mxu0 %v66
    %203 = vmatprep.subr.mxu0 %v69
    %204 = vmatpush1.msra.mxu0 %v68
    %205 = vmatprep.subr.mxu0 %v71
    %206 = vmatpush1.msra.mxu0 %v70
    %207 = vmatprep.subr.mxu0 %v73
    %208 = vmatpush1.msra.mxu0 %v72
    %209 = vmatprep.subr.mxu0 %v75
    %210 = vmatpush1.msra.mxu0 %v74
    %211 = vmatprep.subr.mxu0 %v77
    %212 = vmatpush1.msra.mxu0 %v76
    %213 = vmatprep.subr.mxu0 %v79
    %214 = vmatpush1.msra.mxu0 %v78
    %215 = vmatprep.subr.mxu0 %v81
    %216 = vmatpush1.msra.mxu0 %v80
    %217 = vmatprep.subr.mxu0 %v83
    %218 = vmatpush1.msra.mxu0 %v82
    %219 = vmatprep.subr.mxu0 %v85
    %220 = vmatpush1.msra.mxu0 %v84
    %221 = vmatprep.subr.mxu0 %v87
    %222 = vmatpush1.msra.mxu0 %v86
    %223 = vmatprep.subr.mxu0 %v89
    %224 = vmatpush1.msra.mxu0 %v88
    %225 = vmatprep.subr.mxu0 %v91
    %226 = vmatpush1.msra.mxu0 %v90
    %227 = vmatprep.subr.mxu0 %v93
    %228 = vmatpush1.msra.mxu0 %v92
    %229 = vmatprep.subr.mxu0 %v95
    %230 = vmatpush1.msra.mxu0 %v94
    %231 = vmatprep.subr.mxu0 0.0
    %232 = vmatpush1.msra.mxu0 0.0
    %233 = vmatprep.subr.mxu0 0.0
    %234 = vmatpush1.msra.mxu0 0.0
    %235 = vmatprep.subr.mxu0 0.0
    %236 = vmatpush1.msra.mxu0 0.0
    %237 = vmatprep.subr.mxu0 0.0
    %238 = vmatpush1.msra.mxu0 0.0
    %239 = vmatprep.subr.mxu0 0.0
    %240 = vmatpush1.msra.mxu0 0.0
    %241 = vmatprep.subr.mxu0 0.0
    %242 = vmatpush1.msra.mxu0 0.0
    %243 = vmatprep.subr.mxu0 0.0
    %244 = vmatpush1.msra.mxu0 0.0
    %245 = vmatprep.subr.mxu0 0.0
    %246 = vmatpush1.msra.mxu0 0.0
    %247 = vmatprep.subr.mxu0 0.0
    %248 = vmatpush1.msra.mxu0 0.0
    %249 = vmatprep.subr.mxu0 0.0
    %250 = vmatpush1.msra.mxu0 0.0
    %251 = vmatprep.subr.mxu0 0.0
    %252 = vmatpush1.msra.mxu0 0.0
    %253 = vmatprep.subr.mxu0 0.0
    %254 = vmatpush1.msra.mxu0 0.0
    %255 = vmatprep.subr.mxu0 0.0
    %256 = vmatpush1.msra.mxu0 0.0
    %257 = vmatprep.subr.mxu0 0.0
    %258 = vmatpush1.msra.mxu0 0.0
    %259 = vmatprep.subr.mxu0 0.0
    %260 = vmatpush1.msra.mxu0 0.0
    %261 = vmatprep.subr.mxu0 0.0
    %262 = vmatpush1.msra.mxu0 0.0
    %263 = vmatprep.mubr.f32.mxu0 0.0
    %264 = vmatmul.mubr.f32.gmra.mrb[0].mxu0 %v63
    %v265 = vpop.f32.mrb[0].mxu0
    %v266 = vadd.f32 %v195, %v265
    %v267 = vpop.f32.mrb[0].mxu0
    %v268 = vadd.f32 %v197, %v267
    %269 = vdwg.mxu0
    %v270 = vld [vmem:[%s4] sm:$0x1]
    %v272 = vlaneseq
    %v273 = vshrl.u32 %v272, 7
    %v274 = vsub.s32 0, %v273
    %v275 = vrot.slane %v270, %v274
    %v277 = vadd.f32 %v266, %v275
    %v278 = vld [vmem:[%s5] sm:$0x1]
    %v280 = vlaneseq
    %v281 = vshrl.u32 %v280, 7
    %v282 = vsub.s32 0, %v281
    %v283 = vrot.slane %v278, %v282
    %v285 = vadd.f32 %v277, %v283
    %v286 = vld [vmem:[%s6] sm:$0x1]
    %v288 = vlaneseq
    %v289 = vshrl.u32 %v288, 7
    %v290 = vsub.s32 0, %v289
    %v291 = vrot.slane %v286, %v290
    %v293 = vadd.f32 %v268, %v291
    %v294 = vlaneseq
    %v295 = vand.u32 %v294, 127
    %296 = vset.pattern.permute.xlu0 0
    %297 = vperm.xlu0 %296, %v62
    %v298 = vpop.permute.xlu0 %297
    %vm299 = vcmp.eq.s32.totalorder %v295, %v298
    %v300 = vsel %vm299, 1, 0
    %v301 = vcvt.s32.f32 %v300
    %v302 = vmul.f32 %v285, -0.5
    %303 = vst [vmem:[#allocation7] sm:$0xff] %v302
    %v304 = vmul.f32 %v301, %v277
    %v305 = vmul.f32 %v304, 0.1
    %v306 = vadd.f32 %v285, %v305
    %v307 = vmul.f32 %v306, -0.5
    %308 = vst [vmem:[#allocation8] sm:$0xff] %v307
    %v309 = vmul.f32 %v301, %v293
    %v310 = vrot.slane %v309, 4
    %v311 = vadd.f32 %v309, %v310
    %v312 = vrot.slane %v311, 2
    %v313 = vadd.f32 %v311, %v312
    %v314 = vrot.slane %v313, 1
    %v315 = vadd.f32 %v313, %v314
    %v316 = vmul.f32 %v315, 0.5
    %317 = vst [vmem:[#allocation10] sm:$0x1] %v316
    // Predicated region
    $region38: #{tpu_custom_call.1} parent=1 // pred_check
      _
    $region39: #{tpu_custom_call.1} parent=1 // pred_check_branch
      %319 = sbr.rel (0) target = $region41
    $region40: #{tpu_custom_call.1} parent=1 // pred_region
      %s321 = ssub.s32 128, 128
      %322 = vsyncadd [#allocation4], %s321
      %s324 = sshll.u32 [#allocation7], 4
      %s325 = int_to_ptr.vmem [resolvable:$true] %s324
      %327 = dma.vmem_to_hbm [thread:$0]  %s325, 128, %s7, [#allocation4]
    $region41: #{tpu_custom_call.1} parent=1 // pred_fallthru
      _
    // Predicated region
    $region42: #{tpu_custom_call.1} parent=1 // pred_check
      _
    $region43: #{tpu_custom_call.1} parent=1 // pred_check_branch
      %329 = sbr.rel (0) target = $region45
    $region44: #{tpu_custom_call.1} parent=1 // pred_region
      %s331 = ssub.s32 128, 128
      %332 = vsyncadd [#allocation9], %s331
      %s334 = sshll.u32 [#allocation8], 4
      %s335 = int_to_ptr.vmem [resolvable:$true] %s334
      %337 = dma.vmem_to_hbm [thread:$0]  %s335, 128, %s8, [#allocation9]
    $region45: #{tpu_custom_call.1} parent=1 // pred_fallthru
      _
    // Predicated region
    $region46: #{tpu_custom_call.1} parent=1 // pred_check
      _
    $region47: #{tpu_custom_call.1} parent=1 // pred_check_branch
      %339 = sbr.rel (0) target = $region49
    $region48: #{tpu_custom_call.1} parent=1 // pred_region
      %s341 = ssub.s32 16, 16
      %342 = vsyncadd [#allocation9], %s341
      %s344 = sshll.u32 [#allocation10], 4
      %s345 = int_to_ptr.vmem [resolvable:$true] %s344
      %347 = dma.vmem_to_hbm [thread:$0]  %s345, 16, %s9, [#allocation9]
    $region49: #{tpu_custom_call.1} parent=1 // pred_fallthru
      _
    // Predicated region
    $region50: #{tpu_custom_call.1} parent=1 // pred_check
      _
    $region51: #{tpu_custom_call.1} parent=1 // pred_check_branch
      %349 = sbr.rel (0) target = $region53
    $region52: #{tpu_custom_call.1} parent=1 // pred_region
      %350 = dma.done [#allocation4], 128
    $region53: #{tpu_custom_call.1} parent=1 // pred_fallthru
      _
    // Predicated region
    $region54: #{tpu_custom_call.1} parent=1 // pred_check
      _
    $region55: #{tpu_custom_call.1} parent=1 // pred_check_branch
      %352 = sbr.rel (0) target = $region57
    $region56: #{tpu_custom_call.1} parent=1 // pred_region
      %353 = dma.done [#allocation9], 128
    $region57: #{tpu_custom_call.1} parent=1 // pred_fallthru
      _
    // Predicated region
    $region58: #{tpu_custom_call.1} parent=1 // pred_check
      _
    $region59: #{tpu_custom_call.1} parent=1 // pred_check_branch
      %355 = sbr.rel (0) target = $region61
    $region60: #{tpu_custom_call.1} parent=1 // pred_region
      %356 = dma.done [#allocation9], 16
    $region61: #{tpu_custom_call.1} parent=1 // pred_fallthru
      _
    %357 = vsyncpa [#allocation3], 1
    %358 = vsyncpa [#allocation6], 1
    %359 = vsyncpa [#allocation4], 1
    %360 = vsyncpa [#allocation9], 1

</llo_original>
